<compile_context>
chip_gen: v7x
topology: tpu7x:2x2x1
jax: 0.10.0
libtpu: 0.0.40
codegen_flags: <defaults>
</compile_context>

<pallas_src>
import functools

import jax
import jax.numpy as jnp
from jax import lax
from jax.experimental import pallas as pl
from jax.experimental.pallas import tpu as pltpu

LN_EPS = 1e-5  # PyTorch nn.LayerNorm default


def _round_up(n, m):
    return ((n + m - 1) // m) * m


def _layernorm_masked(x, gamma, beta, true_d):
    """LayerNorm over the last dim of x (f32), where lanes >= true_d are zero padding.

    gamma/beta are zero in the padded lanes, so padded outputs are exactly 0.
    """
    if true_d == x.shape[-1]:
        mean = jnp.mean(x, axis=-1, keepdims=True)
        xc = x - mean
        var = jnp.mean(xc * xc, axis=-1, keepdims=True)
    else:
        lane = lax.broadcasted_iota(jnp.int32, x.shape, 1)
        valid = lane < true_d
        mean = jnp.sum(x, axis=-1, keepdims=True) / true_d
        xc = jnp.where(valid, x - mean, 0.0)
        var = jnp.sum(xc * xc, axis=-1, keepdims=True) / true_d
    inv = lax.rsqrt(var + LN_EPS)
    return xc * inv * gamma + beta


def _gelu_exact(x):
    # nn.GELU() default: exact erf formulation (keep exact to match PyTorch).
    return 0.5 * x * (1.0 + lax.erf(x * 0.7071067811865476))


def mlp_kernel(x_ref, g1_ref, b1_ref, w1_ref, bi1_ref,
               g2_ref, b2_ref, w2_ref, bi2_ref, o_ref,
               *, din, hidden):
    x = x_ref[...].astype(jnp.float32)

    # norm1 over the true in_features (params already f32).
    h = _layernorm_masked(x, g1_ref[...], b1_ref[...], din)

    # dense1: feed MXU in the weight's native dtype (bf16 stays bf16), f32 accumulate.
    h = jnp.dot(h.astype(w1_ref.dtype), w1_ref[...],
                preferred_element_type=jnp.float32) + bi1_ref[...]

    # norm2 over the true hidden_features + exact GELU, in f32.
    h = _layernorm_masked(h, g2_ref[...], b2_ref[...], hidden)
    h = _gelu_exact(h)

    # dense2.
    out = jnp.dot(h.astype(w2_ref.dtype), w2_ref[...],
                  preferred_element_type=jnp.float32) + bi2_ref[...]

    o_ref[...] = out.astype(o_ref.dtype)


def _vmem_estimate(tm, din_p, h_p, dout_p, act_bytes, w_bytes):
    # Double-buffered activation input/output tiles.
    io = 2 * tm * (din_p + dout_p) * act_bytes
    # Weights + small params (pipeline double-buffers them even though grid-invariant).
    wts = 2 * (din_p * h_p + h_p * dout_p) * w_bytes
    small = 2 * (2 * din_p + 3 * h_p + dout_p) * 4
    # f32 intermediates inside the kernel body.
    interm = tm * (din_p + 2 * h_p + dout_p) * 4
    return io + wts + small + interm


def two_layer_mlp(x, params, *, tile_m=512, vmem_budget_bytes=40 * 1024 * 1024):
    """x: (..., Din). Returns (..., Dout)."""
    orig_shape = x.shape
    din = orig_shape[-1]
    x2 = x.reshape(-1, din)
    M = x2.shape[0]

    g1, b1, w1, bi1, g2, b2, w2, bi2 = (
        params["ln1_g"], params["ln1_b"], params["w1"], params["b1"],
        params["ln2_g"], params["ln2_b"], params["w2"], params["b2"],
    )
    H = w1.shape[1]
    dout = w2.shape[1]

    # Lane-dense feature dims: pad to multiples of 128 (zero padding preserves
    # semantics because LN stats use the true count and padded gamma/beta/bias are 0).
    din_p = _round_up(din, 128)
    H_p = _round_up(H, 128)
    dout_p = _round_up(dout, 128)

    act_bytes = jnp.dtype(x.dtype).itemsize
    w_bytes = jnp.dtype(w1.dtype).itemsize
    sub = {4: 8, 2: 16, 1: 32}.get(act_bytes, 8)   # sublane multiple for the row tile

    # Pick the row tile: large (default 512), multiple of `sub`, no bigger than the
    # (padded) row count, shrunk until the estimated working set fits the VMEM budget
    # (budget chosen to be safe on v7x's 64 MiB per TC).
    tm = min(_round_up(M, sub), _round_up(max(tile_m, sub), sub))
    while tm > sub and _vmem_estimate(tm, din_p, H_p, dout_p,
                                      act_bytes, w_bytes) > vmem_budget_bytes:
        tm = max(sub, _round_up(tm // 2, sub))

    M_p = _round_up(M, tm)

    f32 = jnp.float32
    x_p = jnp.pad(x2, ((0, M_p - M), (0, din_p - din)))
    g1p = jnp.pad(g1.astype(f32), (0, din_p - din)).reshape(1, din_p)
    b1p = jnp.pad(b1.astype(f32), (0, din_p - din)).reshape(1, din_p)
    w1p = jnp.pad(w1, ((0, din_p - din), (0, H_p - H)))
    bi1p = jnp.pad(bi1.astype(f32), (0, H_p - H)).reshape(1, H_p)
    g2p = jnp.pad(g2.astype(f32), (0, H_p - H)).reshape(1, H_p)
    b2p = jnp.pad(b2.astype(f32), (0, H_p - H)).reshape(1, H_p)
    w2p = jnp.pad(w2, ((0, H_p - H), (0, dout_p - dout)))
    bi2p = jnp.pad(bi2.astype(f32), (0, dout_p - dout)).reshape(1, dout_p)

    grid = (M_p // tm,)

    def row_map(i):
        return (i, 0)

    def rep_map(i):
        return (0, 0)

    est = _vmem_estimate(tm, din_p, H_p, dout_p, act_bytes, w_bytes)
    vmem_limit = int(min(max(2 * est, 16 * 1024 * 1024), 64 * 1024 * 1024))

    kern = functools.partial(mlp_kernel, din=din, hidden=H)

    # TODO(synk): for production widths (H/Dout ~ 4k) add a second grid axis over
    # Dout (block w2/output over N, recompute/stash the LN1->GELU prefix per row tile)
    # and single-buffer the grid-invariant weight blocks to fit v7x's 64 MiB VMEM.
    out = pl.pallas_call(
        kern,
        out_shape=jax.ShapeDtypeStruct((M_p, dout_p), x.dtype),
        grid_spec=pltpu.PrefetchScalarGridSpec(
            num_scalar_prefetch=0,
            grid=grid,
            in_specs=[
                pl.BlockSpec((tm, din_p), row_map),     # x rows
                pl.BlockSpec((1, din_p), rep_map),      # ln1 gamma (f32)
                pl.BlockSpec((1, din_p), rep_map),      # ln1 beta  (f32)
                pl.BlockSpec((din_p, H_p), rep_map),    # w1 (native dtype)
                pl.BlockSpec((1, H_p), rep_map),        # b1 (f32)
                pl.BlockSpec((1, H_p), rep_map),        # ln2 gamma (f32)
                pl.BlockSpec((1, H_p), rep_map),        # ln2 beta  (f32)
                pl.BlockSpec((H_p, dout_p), rep_map),   # w2 (native dtype)
                pl.BlockSpec((1, dout_p), rep_map),     # b2 (f32)
            ],
            out_specs=pl.BlockSpec((tm, dout_p), row_map),
        ),
        compiler_params=pltpu.CompilerParams(
            dimension_semantics=("parallel",),
            vmem_limit_bytes=vmem_limit,
        ),
    )(x_p, g1p, b1p, w1p, bi1p, g2p, b2p, w2p, bi2p)

    return out[:M, :dout].reshape(orig_shape[:-1] + (dout,))


def init_params(key, in_features, hidden_features, out_features, dtype=jnp.float32):
    k1, k2, k3, k4 = jax.random.split(key, 4)
    lim1 = 1.0 / (in_features ** 0.5)
    lim2 = 1.0 / (hidden_features ** 0.5)
    return {
        "ln1_g": jnp.ones((in_features,), dtype),
        "ln1_b": jnp.zeros((in_features,), dtype),
        "w1": jax.random.uniform(k1, (in_features, hidden_features), dtype, -lim1, lim1),
        "b1": jax.random.uniform(k2, (hidden_features,), dtype, -lim1, lim1),
        "ln2_g": jnp.ones((hidden_features,), dtype),
        "ln2_b": jnp.zeros((hidden_features,), dtype),
        "w2": jax.random.uniform(k3, (hidden_features, out_features), dtype, -lim2, lim2),
        "b2": jax.random.uniform(k4, (out_features,), dtype, -lim2, lim2),
    }


def _reference(x, p):
    def ln(v, g, b):
        m = jnp.mean(v, axis=-1, keepdims=True)
        var = jnp.mean((v - m) ** 2, axis=-1, keepdims=True)
        return (v - m) / jnp.sqrt(var + LN_EPS) * g + b
    h = ln(x.astype(jnp.float32), p["ln1_g"].astype(jnp.float32), p["ln1_b"].astype(jnp.float32))
    h = h @ p["w1"].astype(jnp.float32) + p["b1"].astype(jnp.float32)
    h = ln(h, p["ln2_g"].astype(jnp.float32), p["ln2_b"].astype(jnp.float32))
    h = jax.nn.gelu(h, approximate=False)
    return h @ p["w2"].astype(jnp.float32) + p["b2"].astype(jnp.float32)


if __name__ == "__main__":
    key = jax.random.PRNGKey(0)
    kx, kp = jax.random.split(key)

    B, S = 2, 8
    in_features, hidden_features, out_features = 32, 64, 16

    x = jax.random.normal(kx, (B, S, in_features), jnp.float32)
    params = init_params(kp, in_features, hidden_features, out_features)

    # f32 path: must match the exact reference tightly.
    out = two_layer_mlp(x, params)
    out = jax.block_until_ready(out)
    ref = _reference(x, params)
    assert out.shape == (B, S, out_features)
    assert jnp.allclose(out, ref, atol=1e-4, rtol=1e-4), (
        f"f32 max abs err {jnp.max(jnp.abs(out - ref))}")

    # bf16 path: weights/activations fed to the MXU in bf16, f32 accumulation.
    x_bf = x.astype(jnp.bfloat16)
    params_bf = {k: v.astype(jnp.bfloat16) for k, v in params.items()}
    out_bf = two_layer_mlp(x_bf, params_bf)
    out_bf = jax.block_until_ready(out_bf)
    assert out_bf.shape == (B, S, out_features)
    assert jnp.allclose(out_bf.astype(jnp.float32), ref, atol=1e-1, rtol=1e-1), (
        f"bf16 max abs err {jnp.max(jnp.abs(out_bf.astype(jnp.float32) - ref))}")

    print("KERNEL_OK")
</pallas_src>

<mosaic_0001>
module attributes {stable_mosaic.version = 11 : i64} {
  func.func @mlp_kernel(%arg0: i32, %arg1: memref<16x128xf32, #tpu.memory_space<vmem>>, %arg2: memref<1x128xf32, #tpu.memory_space<vmem>>, %arg3: memref<1x128xf32, #tpu.memory_space<vmem>>, %arg4: memref<128x128xf32, #tpu.memory_space<vmem>>, %arg5: memref<1x128xf32, #tpu.memory_space<vmem>>, %arg6: memref<1x128xf32, #tpu.memory_space<vmem>>, %arg7: memref<1x128xf32, #tpu.memory_space<vmem>>, %arg8: memref<128x128xf32, #tpu.memory_space<vmem>>, %arg9: memref<1x128xf32, #tpu.memory_space<vmem>>, %arg10: memref<16x128xf32, #tpu.memory_space<vmem>>) attributes {dimension_semantics = [#tpu.dimension_semantics<parallel>], iteration_bounds = array<i64: 1>, scalar_prefetch = 0 : i64, scratch_operands = 0 : i64, tpu.core_type = #tpu.core_type<tc>, window_params = [{transform_indices = @transform_0, window_bounds = array<i64: 16, 128>}, {pipeline_mode = #tpu.pipeline_mode<synchronous>, transform_indices = @transform_1, window_bounds = array<i64: 1, 128>}, {pipeline_mode = #tpu.pipeline_mode<synchronous>, transform_indices = @transform_2, window_bounds = array<i64: 1, 128>}, {pipeline_mode = #tpu.pipeline_mode<synchronous>, transform_indices = @transform_3, window_bounds = array<i64: 128, 128>}, {pipeline_mode = #tpu.pipeline_mode<synchronous>, transform_indices = @transform_4, window_bounds = array<i64: 1, 128>}, {pipeline_mode = #tpu.pipeline_mode<synchronous>, transform_indices = @transform_5, window_bounds = array<i64: 1, 128>}, {pipeline_mode = #tpu.pipeline_mode<synchronous>, transform_indices = @transform_6, window_bounds = array<i64: 1, 128>}, {pipeline_mode = #tpu.pipeline_mode<synchronous>, transform_indices = @transform_7, window_bounds = array<i64: 128, 128>}, {pipeline_mode = #tpu.pipeline_mode<synchronous>, transform_indices = @transform_8, window_bounds = array<i64: 1, 128>}, {transform_indices = @transform_9, window_bounds = array<i64: 16, 128>}]} {
    %c0 = arith.constant 0 : index
    %c0_0 = arith.constant 0 : index
    %0 = vector.load %arg1[%c0, %c0_0] : memref<16x128xf32, #tpu.memory_space<vmem>>, vector<16x128xf32>
    %c0_1 = arith.constant 0 : index
    %c0_2 = arith.constant 0 : index
    %1 = vector.load %arg2[%c0_1, %c0_2] : memref<1x128xf32, #tpu.memory_space<vmem>>, vector<1x128xf32>
    %c0_3 = arith.constant 0 : index
    %c0_4 = arith.constant 0 : index
    %2 = vector.load %arg3[%c0_3, %c0_4] : memref<1x128xf32, #tpu.memory_space<vmem>>, vector<1x128xf32>
    %3 = tpu.iota {dimensions = array<i32: 1>} : vector<16x128xi32>
    %c32_i32 = arith.constant 32 : i32
    %4 = vector.broadcast %c32_i32 : i32 to vector<16x128xi32>
    %5 = arith.cmpi slt, %3, %4 : vector<16x128xi32>
    %cst = arith.constant dense<0.000000e+00> : vector<16xf32>
    %6 = vector.multi_reduction <add>, %0, %cst [1] : vector<16x128xf32> to vector<16xf32>
    %7 = vector.shape_cast %6 : vector<16xf32> to vector<16x1xf32>
    %cst_5 = arith.constant 3.200000e+01 : f32
    %8 = vector.broadcast %cst_5 : f32 to vector<16x1xf32>
    %9 = arith.divf %7, %8 : vector<16x1xf32>
    %10 = vector.broadcast %9 : vector<16x1xf32> to vector<16x128xf32>
    %11 = arith.subf %0, %10 : vector<16x128xf32>
    %cst_6 = arith.constant 0.000000e+00 : f32
    %12 = vector.broadcast %cst_6 : f32 to vector<16x128xf32>
    %13 = arith.select %5, %11, %12 : vector<16x128xi1>, vector<16x128xf32>
    %14 = arith.mulf %13, %13 : vector<16x128xf32>
    %cst_7 = arith.constant dense<0.000000e+00> : vector<16xf32>
    %15 = vector.multi_reduction <add>, %14, %cst_7 [1] : vector<16x128xf32> to vector<16xf32>
    %16 = vector.shape_cast %15 : vector<16xf32> to vector<16x1xf32>
    %cst_8 = arith.constant 3.200000e+01 : f32
    %17 = vector.broadcast %cst_8 : f32 to vector<16x1xf32>
    %18 = arith.divf %16, %17 : vector<16x1xf32>
    %cst_9 = arith.constant 9.99999974E-6 : f32
    %19 = vector.broadcast %cst_9 : f32 to vector<16x1xf32>
    %20 = arith.addf %18, %19 : vector<16x1xf32>
    %21 = math.rsqrt %20 : vector<16x1xf32>
    %22 = vector.broadcast %21 : vector<16x1xf32> to vector<16x128xf32>
    %23 = arith.mulf %13, %22 : vector<16x128xf32>
    %24 = vector.broadcast %1 : vector<1x128xf32> to vector<16x128xf32>
    %25 = arith.mulf %23, %24 : vector<16x128xf32>
    %26 = vector.broadcast %2 : vector<1x128xf32> to vector<16x128xf32>
    %27 = arith.addf %25, %26 : vector<16x128xf32>
    %c0_10 = arith.constant 0 : index
    %c0_11 = arith.constant 0 : index
    %28 = vector.load %arg4[%c0_10, %c0_11] : memref<128x128xf32, #tpu.memory_space<vmem>>, vector<128x128xf32>
    %cst_12 = arith.constant dense<0.000000e+00> : vector<16x128xf32>
    %29 = tpu.matmul %27, %28, %cst_12 {dimension_numbers = #tpu.dot_dimension_numbers<[1], [0], [0], [1], [0, 0, 1, 1], [], []>} : vector<16x128xf32>, vector<128x128xf32>, vector<16x128xf32> -> vector<16x128xf32>
    %c0_13 = arith.constant 0 : index
    %c0_14 = arith.constant 0 : index
    %30 = vector.load %arg5[%c0_13, %c0_14] : memref<1x128xf32, #tpu.memory_space<vmem>>, vector<1x128xf32>
    %31 = vector.broadcast %30 : vector<1x128xf32> to vector<16x128xf32>
    %32 = arith.addf %29, %31 : vector<16x128xf32>
    %c0_15 = arith.constant 0 : index
    %c0_16 = arith.constant 0 : index
    %33 = vector.load %arg6[%c0_15, %c0_16] : memref<1x128xf32, #tpu.memory_space<vmem>>, vector<1x128xf32>
    %c0_17 = arith.constant 0 : index
    %c0_18 = arith.constant 0 : index
    %34 = vector.load %arg7[%c0_17, %c0_18] : memref<1x128xf32, #tpu.memory_space<vmem>>, vector<1x128xf32>
    %35 = tpu.iota {dimensions = array<i32: 1>} : vector<16x128xi32>
    %c64_i32 = arith.constant 64 : i32
    %36 = vector.broadcast %c64_i32 : i32 to vector<16x128xi32>
    %37 = arith.cmpi slt, %35, %36 : vector<16x128xi32>
    %cst_19 = arith.constant dense<0.000000e+00> : vector<16xf32>
    %38 = vector.multi_reduction <add>, %32, %cst_19 [1] : vector<16x128xf32> to vector<16xf32>
    %39 = vector.shape_cast %38 : vector<16xf32> to vector<16x1xf32>
    %cst_20 = arith.constant 6.400000e+01 : f32
    %40 = vector.broadcast %cst_20 : f32 to vector<16x1xf32>
    %41 = arith.divf %39, %40 : vector<16x1xf32>
    %42 = vector.broadcast %41 : vector<16x1xf32> to vector<16x128xf32>
    %43 = arith.subf %32, %42 : vector<16x128xf32>
    %cst_21 = arith.constant 0.000000e+00 : f32
    %44 = vector.broadcast %cst_21 : f32 to vector<16x128xf32>
    %45 = arith.select %37, %43, %44 : vector<16x128xi1>, vector<16x128xf32>
    %46 = arith.mulf %45, %45 : vector<16x128xf32>
    %cst_22 = arith.constant dense<0.000000e+00> : vector<16xf32>
    %47 = vector.multi_reduction <add>, %46, %cst_22 [1] : vector<16x128xf32> to vector<16xf32>
    %48 = vector.shape_cast %47 : vector<16xf32> to vector<16x1xf32>
    %cst_23 = arith.constant 6.400000e+01 : f32
    %49 = vector.broadcast %cst_23 : f32 to vector<16x1xf32>
    %50 = arith.divf %48, %49 : vector<16x1xf32>
    %cst_24 = arith.constant 9.99999974E-6 : f32
    %51 = vector.broadcast %cst_24 : f32 to vector<16x1xf32>
    %52 = arith.addf %50, %51 : vector<16x1xf32>
    %53 = math.rsqrt %52 : vector<16x1xf32>
    %54 = vector.broadcast %53 : vector<16x1xf32> to vector<16x128xf32>
    %55 = arith.mulf %45, %54 : vector<16x128xf32>
    %56 = vector.broadcast %33 : vector<1x128xf32> to vector<16x128xf32>
    %57 = arith.mulf %55, %56 : vector<16x128xf32>
    %58 = vector.broadcast %34 : vector<1x128xf32> to vector<16x128xf32>
    %59 = arith.addf %57, %58 : vector<16x128xf32>
    %cst_25 = arith.constant 5.000000e-01 : f32
    %60 = vector.broadcast %cst_25 : f32 to vector<16x128xf32>
    %61 = arith.mulf %60, %59 : vector<16x128xf32>
    %cst_26 = arith.constant 0.707106769 : f32
    %62 = vector.broadcast %cst_26 : f32 to vector<16x128xf32>
    %63 = arith.mulf %59, %62 : vector<16x128xf32>
    %64 = math.erf %63 : vector<16x128xf32>
    %cst_27 = arith.constant 1.000000e+00 : f32
    %65 = vector.broadcast %cst_27 : f32 to vector<16x128xf32>
    %66 = arith.addf %65, %64 : vector<16x128xf32>
    %67 = arith.mulf %61, %66 : vector<16x128xf32>
    %c0_28 = arith.constant 0 : index
    %c0_29 = arith.constant 0 : index
    %68 = vector.load %arg8[%c0_28, %c0_29] : memref<128x128xf32, #tpu.memory_space<vmem>>, vector<128x128xf32>
    %cst_30 = arith.constant dense<0.000000e+00> : vector<16x128xf32>
    %69 = tpu.matmul %67, %68, %cst_30 {dimension_numbers = #tpu.dot_dimension_numbers<[1], [0], [0], [1], [0, 0, 1, 1], [], []>} : vector<16x128xf32>, vector<128x128xf32>, vector<16x128xf32> -> vector<16x128xf32>
    %c0_31 = arith.constant 0 : index
    %c0_32 = arith.constant 0 : index
    %70 = vector.load %arg9[%c0_31, %c0_32] : memref<1x128xf32, #tpu.memory_space<vmem>>, vector<1x128xf32>
    %71 = vector.broadcast %70 : vector<1x128xf32> to vector<16x128xf32>
    %72 = arith.addf %69, %71 : vector<16x128xf32>
    %c0_33 = arith.constant 0 : index
    %c0_34 = arith.constant 0 : index
    %73 = vector.load %arg10[%c0_33, %c0_34] : memref<16x128xf32, #tpu.memory_space<vmem>>, vector<16x128xf32>
    tpu.vector_store %arg10[%c0_33, %c0_34], %72 {strides = array<i32>} : memref<16x128xf32, #tpu.memory_space<vmem>>, vector<16x128xf32>,
    return
  }
  func.func @transform_0(%arg0: i32) -> (i32, i32) {
    %c0_i32 = arith.constant 0 : i32
    %c0_i32_0 = arith.constant 0 : i32
    return %arg0, %c0_i32 : i32, i32
  }
  func.func @transform_1(%arg0: i32) -> (i32, i32) {
    %c0_i32 = arith.constant 0 : i32
    %c0_i32_0 = arith.constant 0 : i32
    %c0_i32_1 = arith.constant 0 : i32
    return %c0_i32, %c0_i32_0 : i32, i32
  }
  func.func @transform_2(%arg0: i32) -> (i32, i32) {
    %c0_i32 = arith.constant 0 : i32
    %c0_i32_0 = arith.constant 0 : i32
    %c0_i32_1 = arith.constant 0 : i32
    return %c0_i32, %c0_i32_0 : i32, i32
  }
  func.func @transform_3(%arg0: i32) -> (i32, i32) {
    %c0_i32 = arith.constant 0 : i32
    %c0_i32_0 = arith.constant 0 : i32
    %c0_i32_1 = arith.constant 0 : i32
    return %c0_i32, %c0_i32_0 : i32, i32
  }
  func.func @transform_4(%arg0: i32) -> (i32, i32) {
    %c0_i32 = arith.constant 0 : i32
    %c0_i32_0 = arith.constant 0 : i32
    %c0_i32_1 = arith.constant 0 : i32
    return %c0_i32, %c0_i32_0 : i32, i32
  }
  func.func @transform_5(%arg0: i32) -> (i32, i32) {
    %c0_i32 = arith.constant 0 : i32
    %c0_i32_0 = arith.constant 0 : i32
    %c0_i32_1 = arith.constant 0 : i32
    return %c0_i32, %c0_i32_0 : i32, i32
  }
  func.func @transform_6(%arg0: i32) -> (i32, i32) {
    %c0_i32 = arith.constant 0 : i32
    %c0_i32_0 = arith.constant 0 : i32
    %c0_i32_1 = arith.constant 0 : i32
    return %c0_i32, %c0_i32_0 : i32, i32
  }
  func.func @transform_7(%arg0: i32) -> (i32, i32) {
    %c0_i32 = arith.constant 0 : i32
    %c0_i32_0 = arith.constant 0 : i32
    %c0_i32_1 = arith.constant 0 : i32
    return %c0_i32, %c0_i32_0 : i32, i32
  }
  func.func @transform_8(%arg0: i32) -> (i32, i32) {
    %c0_i32 = arith.constant 0 : i32
    %c0_i32_0 = arith.constant 0 : i32
    %c0_i32_1 = arith.constant 0 : i32
    return %c0_i32, %c0_i32_0 : i32, i32
  }
  func.func @transform_9(%arg0: i32) -> (i32, i32) {
    %c0_i32 = arith.constant 0 : i32
    %c0_i32_0 = arith.constant 0 : i32
    return %arg0, %c0_i32 : i32, i32
  }
}

</mosaic_0001>

<llo_original>
// kernel: tpu_custom_call.1
$region0: #{tpu_custom_call.1}
  #allocation0 [shape = 'u32[]', space=smem, size = 0x4, offset = 0x4, fixed_abs, tag = 'smem constant byte address 0x4 - core index']
  #allocation1 [shape = 'u32[144,128]{1,0:T(1,128)}', space=vmem, size = 0x12000, scoped, tag = 'internal scratch']
  %s0 = inlined_call_operand.hbm [shape: f32[16,128], index: 0, kind: input, shape index: {}]
  %s1 = inlined_call_operand.vmem [shape: f32[1,128], index: 1, kind: input, shape index: {}]
  %s2 = inlined_call_operand.vmem [shape: f32[1,128], index: 2, kind: input, shape index: {}]
  %s3 = inlined_call_operand.hbm [shape: f32[128,128], index: 3, kind: input, shape index: {}]
  %s4 = inlined_call_operand.vmem [shape: f32[1,128], index: 4, kind: input, shape index: {}]
  %s5 = inlined_call_operand.vmem [shape: f32[1,128], index: 5, kind: input, shape index: {}]
  %s6 = inlined_call_operand.vmem [shape: f32[1,128], index: 6, kind: input, shape index: {}]
  %s7 = inlined_call_operand.hbm [shape: f32[128,128], index: 7, kind: input, shape index: {}]
  %s8 = inlined_call_operand.vmem [shape: f32[1,128], index: 8, kind: input, shape index: {}]
  %s9 = inlined_call_operand.hbm [shape: f32[16,128], index: 9, kind: output, shape index: {}]
  %s10 = sld [smem:[#allocation0]]
  $region58: #{tpu_custom_call.1} parent=0
    _
  %s12 = ssub.s32 1, %s10
  %s13 = scalar_select 0, %s12, %s10
  $region1: #{tpu_custom_call.1} parent=0
    #allocation2 [shape = 'u8[8192]{0}', space=vmem, size = 0x2000, scoped, tag = 'input window, operand 0, single buffered']
    #allocation3 [shape = 's32[1]{0}', space=sflag, size = 0x4, scoped, tag = 'scoped memory for tpu_custom_call.1']
    #allocation4 [shape = 's32[1]{0}', space=sflag, size = 0x4, scoped, tag = 'scoped memory for tpu_custom_call.1']
    #allocation5 [shape = 'u8[65536]{0}', space=vmem, size = 0x10000, scoped, tag = 'input window, operand 3, single buffered']
    #allocation6 [shape = 's32[1]{0}', space=sflag, size = 0x4, scoped, tag = 'scoped memory for tpu_custom_call.1']
    #allocation7 [shape = 'u8[65536]{0}', space=vmem, size = 0x10000, scoped, tag = 'input window, operand 7, single buffered']
    #allocation8 [shape = 'u8[8192]{0}', space=vmem, size = 0x2000, scoped, tag = 'output window, operand 0, single buffered']
    %14 = vsyncpa [#allocation3], 0
    %15 = vsyncpa [#allocation6], 0
    %16 = vsyncpa [#allocation4], 0
    // Predicated region
    $region2: #{tpu_custom_call.1} parent=1 // pred_check
      _
    $region3: #{tpu_custom_call.1} parent=1 // pred_check_branch
      %18 = sbr.rel (0) target = $region5
    $region4: #{tpu_custom_call.1} parent=1 // pred_region
      %s20 = ssub.s32 256, 256
      %21 = vsyncadd [#allocation3], %s20
      %s22 = sshll.u32 [#allocation2], 4
      %s23 = int_to_ptr.vmem [resolvable:$true] %s22
      %28 = dma.hbm_to_vmem [thread:$0]  %s0, 256, %s23, [#allocation3], 128, 128, 8
    $region5: #{tpu_custom_call.1} parent=1 // pred_fallthru
      _
    // Predicated region
    $region6: #{tpu_custom_call.1} parent=1 // pred_check
      _
    $region7: #{tpu_custom_call.1} parent=1 // pred_check_branch
      %30 = sbr.rel (0) target = $region9
    $region8: #{tpu_custom_call.1} parent=1 // pred_region
      _
    $region9: #{tpu_custom_call.1} parent=1 // pred_fallthru
      _
    // Predicated region
    $region10: #{tpu_custom_call.1} parent=1 // pred_check
      _
    $region11: #{tpu_custom_call.1} parent=1 // pred_check_branch
      %32 = sbr.rel (0) target = $region13
    $region12: #{tpu_custom_call.1} parent=1 // pred_region
      _
    $region13: #{tpu_custom_call.1} parent=1 // pred_fallthru
      _
    // Predicated region
    $region14: #{tpu_custom_call.1} parent=1 // pred_check
      _
    $region15: #{tpu_custom_call.1} parent=1 // pred_check_branch
      %34 = sbr.rel (0) target = $region17
    $region16: #{tpu_custom_call.1} parent=1 // pred_region
      %s36 = ssub.s32 2048, 2048
      %37 = vsyncadd [#allocation6], %s36
      %s38 = sshll.u32 [#allocation5], 4
      %s39 = int_to_ptr.vmem [resolvable:$true] %s38
      %44 = dma.hbm_to_vmem [thread:$0]  %s3, 2048, %s39, [#allocation6], 128, 128, 8
    $region17: #{tpu_custom_call.1} parent=1 // pred_fallthru
      _
    // Predicated region
    $region18: #{tpu_custom_call.1} parent=1 // pred_check
      _
    $region19: #{tpu_custom_call.1} parent=1 // pred_check_branch
      %46 = sbr.rel (0) target = $region21
    $region20: #{tpu_custom_call.1} parent=1 // pred_region
      _
    $region21: #{tpu_custom_call.1} parent=1 // pred_fallthru
      _
    // Predicated region
    $region22: #{tpu_custom_call.1} parent=1 // pred_check
      _
    $region23: #{tpu_custom_call.1} parent=1 // pred_check_branch
      %48 = sbr.rel (0) target = $region25
    $region24: #{tpu_custom_call.1} parent=1 // pred_region
      _
    $region25: #{tpu_custom_call.1} parent=1 // pred_fallthru
      _
    // Predicated region
    $region26: #{tpu_custom_call.1} parent=1 // pred_check
      _
    $region27: #{tpu_custom_call.1} parent=1 // pred_check_branch
      %50 = sbr.rel (0) target = $region29
    $region28: #{tpu_custom_call.1} parent=1 // pred_region
      _
    $region29: #{tpu_custom_call.1} parent=1 // pred_fallthru
      _
    // Predicated region
    $region30: #{tpu_custom_call.1} parent=1 // pred_check
      _
    $region31: #{tpu_custom_call.1} parent=1 // pred_check_branch
      %52 = sbr.rel (0) target = $region33
    $region32: #{tpu_custom_call.1} parent=1 // pred_region
      %s54 = ssub.s32 2048, 2048
      %55 = vsyncadd [#allocation6], %s54
      %s56 = sshll.u32 [#allocation7], 4
      %s57 = int_to_ptr.vmem [resolvable:$true] %s56
      %62 = dma.hbm_to_vmem [thread:$0]  %s7, 2048, %s57, [#allocation6], 128, 128, 8
    $region33: #{tpu_custom_call.1} parent=1 // pred_fallthru
      _
    // Predicated region
    $region34: #{tpu_custom_call.1} parent=1 // pred_check
      _
    $region35: #{tpu_custom_call.1} parent=1 // pred_check_branch
      %64 = sbr.rel (0) target = $region37
    $region36: #{tpu_custom_call.1} parent=1 // pred_region
      _
    $region37: #{tpu_custom_call.1} parent=1 // pred_fallthru
      _
    // Predicated region
    $region38: #{tpu_custom_call.1} parent=1 // pred_check
      _
    $region39: #{tpu_custom_call.1} parent=1 // pred_check_branch
      %66 = sbr.rel (0) target = $region41
    $region40: #{tpu_custom_call.1} parent=1 // pred_region
      %67 = dma.done [#allocation3], 256
    $region41: #{tpu_custom_call.1} parent=1 // pred_fallthru
      _
    // Predicated region
    $region42: #{tpu_custom_call.1} parent=1 // pred_check
      _
    $region43: #{tpu_custom_call.1} parent=1 // pred_check_branch
      %69 = sbr.rel (0) target = $region45
    $region44: #{tpu_custom_call.1} parent=1 // pred_region
      %70 = dma.done [#allocation6], 2048
    $region45: #{tpu_custom_call.1} parent=1 // pred_fallthru
      _
    // Predicated region
    $region46: #{tpu_custom_call.1} parent=1 // pred_check
      _
    $region47: #{tpu_custom_call.1} parent=1 // pred_check_branch
      %72 = sbr.rel (0) target = $region49
    $region48: #{tpu_custom_call.1} parent=1 // pred_region
      %73 = dma.done [#allocation6], 2048
    $region49: #{tpu_custom_call.1} parent=1 // pred_fallthru
      _
    %v74 = vld [vmem:[#allocation2] sm:$0xff]
    %v75 = vld [vmem:[#allocation2 + $0x8] sm:$0xff]
    %v76 = vld [vmem:[%s1] sm:$0x1]
    %v77 = vld [vmem:[%s2] sm:$0x1]
    %v78 = vlaneseq
    %v79 = vand.u32 %v78, 127
    %vm80 = vcmp.lt.s32.totalorder %v79, 32
    %81 = vadd.xlane.f32.xlu0 %v74
    %v82 = vpop.xlane.xlu0 %81
    %83 = vadd.xlane.f32.xlu0 %v75
    %v84 = vpop.xlane.xlu0 %83
    %v85 = vrcp.pop 32.0
    %v86 = vmul.f32 %v82, %v85
    %v87 = vmul.f32 %v84, %v85
    %v88 = vsub.f32 %v74, %v86
    %v89 = vsub.f32 %v75, %v87
    %v90 = vsel %vm80, %v88, 0.0
    %v91 = vsel %vm80, %v89, 0.0
    %v92 = vmul.f32 %v90, %v90
    %v93 = vmul.f32 %v91, %v91
    %94 = vadd.xlane.f32.xlu0 %v92
    %v95 = vpop.xlane.xlu0 %94
    %96 = vadd.xlane.f32.xlu0 %v93
    %v97 = vpop.xlane.xlu0 %96
    %v98 = vmul.f32 %v95, %v85
    %v99 = vmul.f32 %v97, %v85
    %v100 = vadd.f32 %v98, 1e-05
    %v101 = vadd.f32 %v99, 1e-05
    %v102 = vrsqrt.pop %v100
    %v103 = vrsqrt.pop %v101
    %v104 = vmul.f32 %v90, %v102
    %v105 = vmul.f32 %v91, %v103
    %v107 = vlaneseq
    %v108 = vshrl.u32 %v107, 7
    %v109 = vsub.s32 0, %v108
    %v110 = vrot.slane %v76, %v109
    %v112 = vmul.f32 %v104, %v110
    %v113 = vmul.f32 %v105, %v110
    %v115 = vlaneseq
    %v116 = vshrl.u32 %v115, 7
    %v117 = vsub.s32 0, %v116
    %v118 = vrot.slane %v77, %v117
    %v120 = vadd.f32 %v112, %v118
    %v121 = vadd.f32 %v113, %v118
    %v122 = vld [vmem:[#allocation5] sm:$0xff]
    %v123 = vld [vmem:[#allocation5 + $0x8] sm:$0xff]
    %v124 = vld [vmem:[#allocation5 + $0x10] sm:$0xff]
    %v125 = vld [vmem:[#allocation5 + $0x18] sm:$0xff]
    %v126 = vld [vmem:[#allocation5 + $0x20] sm:$0xff]
    %v127 = vld [vmem:[#allocation5 + $0x28] sm:$0xff]
    %v128 = vld [vmem:[#allocation5 + $0x30] sm:$0xff]
    %v129 = vld [vmem:[#allocation5 + $0x38] sm:$0xff]
    %v130 = vld [vmem:[#allocation5 + $0x40] sm:$0xff]
    %v131 = vld [vmem:[#allocation5 + $0x48] sm:$0xff]
    %v132 = vld [vmem:[#allocation5 + $0x50] sm:$0xff]
    %v133 = vld [vmem:[#allocation5 + $0x58] sm:$0xff]
    %v134 = vld [vmem:[#allocation5 + $0x60] sm:$0xff]
    %v135 = vld [vmem:[#allocation5 + $0x68] sm:$0xff]
    %v136 = vld [vmem:[#allocation5 + $0x70] sm:$0xff]
    %v137 = vld [vmem:[#allocation5 + $0x78] sm:$0xff]
    %v138 = vld [vmem:[%s4] sm:$0x1]
    %v140 = vlaneseq
    %v141 = vshrl.u32 %v140, 7
    %v142 = vsub.s32 0, %v141
    %v143 = vrot.slane %v138, %v142
    %145 = vmatprep.subr.mxu0 0.0
    %146 = vmatpush1.msra.mxu0 %v122
    %147 = vmatprep.subr.mxu0 0.0
    %148 = vmatpush1.msra.mxu0 %v123
    %149 = vmatprep.subr.mxu0 0.0
    %150 = vmatpush1.msra.mxu0 %v124
    %151 = vmatprep.subr.mxu0 0.0
    %152 = vmatpush1.msra.mxu0 %v125
    %153 = vmatprep.subr.mxu0 0.0
    %154 = vmatpush1.msra.mxu0 %v126
    %155 = vmatprep.subr.mxu0 0.0
    %156 = vmatpush1.msra.mxu0 %v127
    %157 = vmatprep.subr.mxu0 0.0
    %158 = vmatpush1.msra.mxu0 %v128
    %159 = vmatprep.subr.mxu0 0.0
    %160 = vmatpush1.msra.mxu0 %v129
    %161 = vmatprep.subr.mxu0 0.0
    %162 = vmatpush1.msra.mxu0 %v130
    %163 = vmatprep.subr.mxu0 0.0
    %164 = vmatpush1.msra.mxu0 %v131
    %165 = vmatprep.subr.mxu0 0.0
    %166 = vmatpush1.msra.mxu0 %v132
    %167 = vmatprep.subr.mxu0 0.0
    %168 = vmatpush1.msra.mxu0 %v133
    %169 = vmatprep.subr.mxu0 0.0
    %170 = vmatpush1.msra.mxu0 %v134
    %171 = vmatprep.subr.mxu0 0.0
    %172 = vmatpush1.msra.mxu0 %v135
    %173 = vmatprep.subr.mxu0 0.0
    %174 = vmatpush1.msra.mxu0 %v136
    %175 = vmatprep.subr.mxu0 0.0
    %176 = vmatpush1.msra.mxu0 %v137
    %177 = vmatprep.subr.mxu0 0.0
    %178 = vmatpush1.msra.mxu0 0.0
    %179 = vmatprep.subr.mxu0 0.0
    %180 = vmatpush1.msra.mxu0 0.0
    %181 = vmatprep.subr.mxu0 0.0
    %182 = vmatpush1.msra.mxu0 0.0
    %183 = vmatprep.subr.mxu0 0.0
    %184 = vmatpush1.msra.mxu0 0.0
    %185 = vmatprep.subr.mxu0 0.0
    %186 = vmatpush1.msra.mxu0 0.0
    %187 = vmatprep.subr.mxu0 0.0
    %188 = vmatpush1.msra.mxu0 0.0
    %189 = vmatprep.subr.mxu0 0.0
    %190 = vmatpush1.msra.mxu0 0.0
    %191 = vmatprep.subr.mxu0 0.0
    %192 = vmatpush1.msra.mxu0 0.0
    %193 = vmatprep.subr.mxu0 0.0
    %194 = vmatpush1.msra.mxu0 0.0
    %195 = vmatprep.subr.mxu0 0.0
    %196 = vmatpush1.msra.mxu0 0.0
    %197 = vmatprep.subr.mxu0 0.0
    %198 = vmatpush1.msra.mxu0 0.0
    %199 = vmatprep.subr.mxu0 0.0
    %200 = vmatpush1.msra.mxu0 0.0
    %201 = vmatprep.subr.mxu0 0.0
    %202 = vmatpush1.msra.mxu0 0.0
    %203 = vmatprep.subr.mxu0 0.0
    %204 = vmatpush1.msra.mxu0 0.0
    %205 = vmatprep.subr.mxu0 0.0
    %206 = vmatpush1.msra.mxu0 0.0
    %207 = vmatprep.subr.mxu0 0.0
    %208 = vmatpush1.msra.mxu0 0.0
    %209 = vmatprep.mubr.f32.mxu0 0.0
    %210 = vmatmul.mubr.f32.gmra.mrb[0].mxu0 %v120
    %v211 = vpop.f32.mrb[0].mxu0
    %v212 = vadd.f32 %v143, %v211
    %v213 = vpop.f32.mrb[0].mxu0
    %214 = vmatprep.mubr.f32.mxu0 0.0
    %215 = vmatmul.mubr.f32.gmra.mrb[0].mxu0 %v121
    %v216 = vpop.f32.mrb[0].mxu0
    %v217 = vadd.f32 %v143, %v216
    %v218 = vpop.f32.mrb[0].mxu0
    %219 = vdwg.mxu0
    %v220 = vld [vmem:[%s5] sm:$0x1]
    %v221 = vld [vmem:[%s6] sm:$0x1]
    %vm222 = vcmp.lt.s32.totalorder %v79, 64
    %223 = vadd.xlane.f32.xlu0 %v212
    %v224 = vpop.xlane.xlu0 %223
    %225 = vadd.xlane.f32.xlu0 %v217
    %v226 = vpop.xlane.xlu0 %225
    %v227 = vrcp.pop 64.0
    %v228 = vmul.f32 %v224, %v227
    %v229 = vmul.f32 %v226, %v227
    %v230 = vsub.f32 %v212, %v228
    %v231 = vsub.f32 %v217, %v229
    %v232 = vsel %vm222, %v230, 0.0
    %v233 = vsel %vm222, %v231, 0.0
    %v234 = vmul.f32 %v232, %v232
    %v235 = vmul.f32 %v233, %v233
    %236 = vadd.xlane.f32.xlu0 %v234
    %v237 = vpop.xlane.xlu0 %236
    %238 = vadd.xlane.f32.xlu0 %v235
    %v239 = vpop.xlane.xlu0 %238
    %v240 = vmul.f32 %v237, %v227
    %v241 = vmul.f32 %v239, %v227
    %v242 = vadd.f32 %v240, 1e-05
    %v243 = vadd.f32 %v241, 1e-05
    %v244 = vrsqrt.pop %v242
    %v245 = vrsqrt.pop %v243
    %v246 = vmul.f32 %v232, %v244
    %v247 = vmul.f32 %v233, %v245
    %v249 = vlaneseq
    %v250 = vshrl.u32 %v249, 7
    %v251 = vsub.s32 0, %v250
    %v252 = vrot.slane %v220, %v251
    %v254 = vmul.f32 %v246, %v252
    %v255 = vmul.f32 %v247, %v252
    %v257 = vlaneseq
    %v258 = vshrl.u32 %v257, 7
    %v259 = vsub.s32 0, %v258
    %v260 = vrot.slane %v221, %v259
    %v262 = vadd.f32 %v254, %v260
    %v263 = vadd.f32 %v255, %v260
    %v264 = vmul.f32 %v262, 0.5
    %v265 = vmul.f32 %v263, 0.5
    %v266 = vmul.f32 %v262, 0.70710677
    %v267 = vmul.f32 %v263, 0.70710677
    %v268 = verf.f32.pop %v266
    %v269 = verf.f32.pop %v267
    %v270 = vadd.f32 %v268, 1.0
    %v271 = vadd.f32 %v269, 1.0
    %v272 = vmul.f32 %v264, %v270
    %v273 = vmul.f32 %v265, %v271
    %v274 = vld [vmem:[#allocation7] sm:$0xff]
    %v275 = vld [vmem:[#allocation7 + $0x8] sm:$0xff]
    %v276 = vld [vmem:[#allocation7 + $0x10] sm:$0xff]
    %v277 = vld [vmem:[#allocation7 + $0x18] sm:$0xff]
    %v278 = vld [vmem:[#allocation7 + $0x20] sm:$0xff]
    %v279 = vld [vmem:[#allocation7 + $0x28] sm:$0xff]
    %v280 = vld [vmem:[#allocation7 + $0x30] sm:$0xff]
    %v281 = vld [vmem:[#allocation7 + $0x38] sm:$0xff]
    %v282 = vld [vmem:[#allocation7 + $0x40] sm:$0xff]
    %v283 = vld [vmem:[#allocation7 + $0x48] sm:$0xff]
    %v284 = vld [vmem:[#allocation7 + $0x50] sm:$0xff]
    %v285 = vld [vmem:[#allocation7 + $0x58] sm:$0xff]
    %v286 = vld [vmem:[#allocation7 + $0x60] sm:$0xff]
    %v287 = vld [vmem:[#allocation7 + $0x68] sm:$0xff]
    %v288 = vld [vmem:[#allocation7 + $0x70] sm:$0xff]
    %v289 = vld [vmem:[#allocation7 + $0x78] sm:$0xff]
    %v290 = vld [vmem:[%s8] sm:$0x1]
    %v292 = vlaneseq
    %v293 = vshrl.u32 %v292, 7
    %v294 = vsub.s32 0, %v293
    %v295 = vrot.slane %v290, %v294
    %297 = vmatprep.subr.mxu0 0.0
    %298 = vmatpush1.msra.mxu0 %v274
    %299 = vmatprep.subr.mxu0 0.0
    %300 = vmatpush1.msra.mxu0 %v275
    %301 = vmatprep.subr.mxu0 0.0
    %302 = vmatpush1.msra.mxu0 %v276
    %303 = vmatprep.subr.mxu0 0.0
    %304 = vmatpush1.msra.mxu0 %v277
    %305 = vmatprep.subr.mxu0 0.0
    %306 = vmatpush1.msra.mxu0 %v278
    %307 = vmatprep.subr.mxu0 0.0
    %308 = vmatpush1.msra.mxu0 %v279
    %309 = vmatprep.subr.mxu0 0.0
    %310 = vmatpush1.msra.mxu0 %v280
    %311 = vmatprep.subr.mxu0 0.0
    %312 = vmatpush1.msra.mxu0 %v281
    %313 = vmatprep.subr.mxu0 0.0
    %314 = vmatpush1.msra.mxu0 %v282
    %315 = vmatprep.subr.mxu0 0.0
    %316 = vmatpush1.msra.mxu0 %v283
    %317 = vmatprep.subr.mxu0 0.0
    %318 = vmatpush1.msra.mxu0 %v284
    %319 = vmatprep.subr.mxu0 0.0
    %320 = vmatpush1.msra.mxu0 %v285
    %321 = vmatprep.subr.mxu0 0.0
    %322 = vmatpush1.msra.mxu0 %v286
    %323 = vmatprep.subr.mxu0 0.0
    %324 = vmatpush1.msra.mxu0 %v287
    %325 = vmatprep.subr.mxu0 0.0
    %326 = vmatpush1.msra.mxu0 %v288
    %327 = vmatprep.subr.mxu0 0.0
    %328 = vmatpush1.msra.mxu0 %v289
    %329 = vmatprep.subr.mxu0 0.0
    %330 = vmatpush1.msra.mxu0 0.0
    %331 = vmatprep.subr.mxu0 0.0
    %332 = vmatpush1.msra.mxu0 0.0
    %333 = vmatprep.subr.mxu0 0.0
    %334 = vmatpush1.msra.mxu0 0.0
    %335 = vmatprep.subr.mxu0 0.0
    %336 = vmatpush1.msra.mxu0 0.0
    %337 = vmatprep.subr.mxu0 0.0
    %338 = vmatpush1.msra.mxu0 0.0
    %339 = vmatprep.subr.mxu0 0.0
    %340 = vmatpush1.msra.mxu0 0.0
    %341 = vmatprep.subr.mxu0 0.0
    %342 = vmatpush1.msra.mxu0 0.0
    %343 = vmatprep.subr.mxu0 0.0
    %344 = vmatpush1.msra.mxu0 0.0
    %345 = vmatprep.subr.mxu0 0.0
    %346 = vmatpush1.msra.mxu0 0.0
    %347 = vmatprep.subr.mxu0 0.0
    %348 = vmatpush1.msra.mxu0 0.0
    %349 = vmatprep.subr.mxu0 0.0
    %350 = vmatpush1.msra.mxu0 0.0
    %351 = vmatprep.subr.mxu0 0.0
    %352 = vmatpush1.msra.mxu0 0.0
    %353 = vmatprep.subr.mxu0 0.0
    %354 = vmatpush1.msra.mxu0 0.0
    %355 = vmatprep.subr.mxu0 0.0
    %356 = vmatpush1.msra.mxu0 0.0
    %357 = vmatprep.subr.mxu0 0.0
    %358 = vmatpush1.msra.mxu0 0.0
    %359 = vmatprep.subr.mxu0 0.0
    %360 = vmatpush1.msra.mxu0 0.0
    %361 = vmatprep.mubr.f32.mxu0 0.0
    %362 = vmatmul.mubr.f32.gmra.mrb[0].mxu0 %v272
    %v363 = vpop.f32.mrb[0].mxu0
    %v364 = vadd.f32 %v295, %v363
    %v365 = vpop.f32.mrb[0].mxu0
    %366 = vmatprep.mubr.f32.mxu0 0.0
    %367 = vmatmul.mubr.f32.gmra.mrb[0].mxu0 %v273
    %v368 = vpop.f32.mrb[0].mxu0
    %v369 = vadd.f32 %v295, %v368
    %v370 = vpop.f32.mrb[0].mxu0
    %371 = vdwg.mxu0
    %372 = vst [vmem:[#allocation8] sm:$0xff] %v364
    %373 = vst [vmem:[#allocation8 + $0x8] sm:$0xff] %v369
    // Predicated region
    $region50: #{tpu_custom_call.1} parent=1 // pred_check
      _
    $region51: #{tpu_custom_call.1} parent=1 // pred_check_branch
      %375 = sbr.rel (0) target = $region53
    $region52: #{tpu_custom_call.1} parent=1 // pred_region
      %s377 = ssub.s32 256, 256
      %378 = vsyncadd [#allocation4], %s377
      %s379 = sshll.u32 [#allocation8], 4
      %s380 = int_to_ptr.vmem [resolvable:$true] %s379
      %385 = dma.vmem_to_hbm [thread:$0]  %s380, 256, %s9, [#allocation4], 128, 128, 8
    $region53: #{tpu_custom_call.1} parent=1 // pred_fallthru
      _
    // Predicated region
    $region54: #{tpu_custom_call.1} parent=1 // pred_check
      _
    $region55: #{tpu_custom_call.1} parent=1 // pred_check_branch
      %387 = sbr.rel (0) target = $region57
    $region56: #{tpu_custom_call.1} parent=1 // pred_region
      %388 = dma.done [#allocation4], 256
    $region57: #{tpu_custom_call.1} parent=1 // pred_fallthru
      _
    %389 = vsyncpa [#allocation3], 1
    %390 = vsyncpa [#allocation6], 1
    %391 = vsyncpa [#allocation4], 1

</llo_original>
